<compile_context>
chip_gen: v5e
topology: v5e:2x2
jax: 0.10.0
libtpu: 0.0.40
codegen_flags: <defaults>
</compile_context>

<pallas_src>
import functools

import jax
import jax.numpy as jnp
import numpy as np
from jax.experimental import pallas as pl
from jax.experimental.pallas import tpu as pltpu


def simple_dynamics_kernel(
    obs_ref,   # [TB, obs_dim]   raw (un-normalized) observations
    act_ref,   # [TB, act_dim]   actions
    w1o_ref,   # [obs_dim, hidden]   layer1 obs rows, obs-normalization folded in
    w1a_ref,   # [act_dim, hidden]   layer1 action rows
    b1_ref,    # [1, hidden]         layer1 bias (normalization folded in), f32
    w2_ref,    # [hidden, hidden]
    b2_ref,    # [1, hidden], f32
    wh_ref,    # [hidden, out_cols]  fused head [wm*dstd | wm | wv | 0-pad]
    bh_ref,    # [1, out_cols]       fused bias [bm*dstd+dmean | bm | bv | 0-pad], f32
    out_ref,   # [TB, out_cols]      (mean_deltas | normalized_mean | normalized_var | pad)
    *,
    obs_dim: int,
):
    cdt = w1o_ref.dtype  # compute dtype for MXU operands (bf16 by default)

    # layer1 (+ folded obs normalization) + relu  -- two K-split dots (K small)
    h = (
        jnp.dot(obs_ref[...].astype(cdt), w1o_ref[...],
                preferred_element_type=jnp.float32)
        + jnp.dot(act_ref[...].astype(cdt), w1a_ref[...],
                  preferred_element_type=jnp.float32)
        + b1_ref[...]
    )
    h = jnp.maximum(h, 0.0)

    # layer2 + relu
    h = jnp.dot(h.astype(cdt), w2_ref[...],
                preferred_element_type=jnp.float32) + b2_ref[...]
    h = jnp.maximum(h, 0.0)

    # fused head: single MXU push -> [TB, out_cols]
    #   cols [0, obs)        : mean_deltas (denormalization folded into W/b)
    #   cols [obs, 2*obs)    : normalized_mean
    #   cols [2*obs, 3*obs)  : logvar logits -> exp(tanh(.))
    #   cols [3*obs, out)    : zero padding (lane-dense output)
    head = jnp.dot(h.astype(cdt), wh_ref[...],
                   preferred_element_type=jnp.float32) + bh_ref[...]

    col = jax.lax.broadcasted_iota(jnp.int32, head.shape, 1)
    var_mask = (col >= 2 * obs_dim) & (col < 3 * obs_dim)
    # exp/tanh go to the EUP slot (off the VALU critical path); one vreg-wide
    # select, then ONE unmasked store of the whole lane-dense slab.
    out_ref[...] = jnp.where(var_mask, jnp.exp(jnp.tanh(head)), head)


def _round_up(x: int, m: int) -> int:
    return ((x + m - 1) // m) * m


def simple_dynamics_forward(
    observation,
    actions,
    params,
    *,
    batch_tile: int = 512,
    compute_dtype=jnp.bfloat16,
):
    observation = jnp.asarray(observation, jnp.float32)
    actions = jnp.asarray(actions, jnp.float32)
    B, obs_dim = observation.shape
    act_dim = actions.shape[1]
    hidden = params["w1"].shape[1]

    # ---- fold obs normalization (x - mean) / std into layer1 (f32, once) ----
    inv_std = 1.0 / params["obs_std"]                          # [1, obs]
    w1_obs = params["w1"][:obs_dim, :] * inv_std.T             # [obs, hidden]
    w1_act = params["w1"][obs_dim:, :]                         # [act, hidden]
    b1 = params["b1"] - (params["obs_mean"] * inv_std) @ params["w1"][:obs_dim, :]

    # ---- fuse mean/logvar heads AND delta denormalization into one head ----
    w_head = jnp.concatenate(
        [params["wm"] * params["delta_std"], params["wm"], params["wv"]], axis=1
    )                                                          # [hidden, 3*obs]
    b_head = jnp.concatenate(
        [params["bm"] * params["delta_std"] + params["delta_mean"],
         params["bm"], params["bv"]], axis=1
    )                                                          # [1, 3*obs]

    # ---- lane-dense output: pad head columns to a multiple of 128 ----
    out_cols = _round_up(3 * obs_dim, 128)
    pad_cols = out_cols - 3 * obs_dim
    if pad_cols:
        w_head = jnp.pad(w_head, ((0, 0), (0, pad_cols)))
        b_head = jnp.pad(b_head, ((0, 0), (0, pad_cols)))

    # ---- bf16 MXU operands (weights pre-cast -> half the weight DMA) ----
    w1_obs = w1_obs.astype(compute_dtype)
    w1_act = w1_act.astype(compute_dtype)
    w2 = params["w2"].astype(compute_dtype)
    w_head = w_head.astype(compute_dtype)
    b2 = params["b2"]  # biases stay f32 (added post-accumulation)

    # ---- batch tiling: multiple-of-8 rows, >=2 tiles whenever B > 8 so the
    #      "parallel" grid axis can shard across both v7x TensorCores ----
    if B <= 8:
        tb = B
    else:
        tb = max(8, min(batch_tile, _round_up(pl.cdiv(B, 2), 8)))
    num_tiles = pl.cdiv(B, tb)
    b_pad = num_tiles * tb
    if b_pad != B:
        observation = jnp.pad(observation, ((0, b_pad - B), (0, 0)))
        actions = jnp.pad(actions, ((0, b_pad - B), (0, 0)))

    kernel = functools.partial(simple_dynamics_kernel, obs_dim=obs_dim)

    out = pl.pallas_call(
        kernel,
        out_shape=jax.ShapeDtypeStruct((b_pad, out_cols), jnp.float32),
        grid=(num_tiles,),
        in_specs=[
            pl.BlockSpec((tb, obs_dim), lambda i: (i, 0)),          # obs tile
            pl.BlockSpec((tb, act_dim), lambda i: (i, 0)),          # act tile
            # constant index_maps: weight blocks stay resident across tiles
            pl.BlockSpec((obs_dim, hidden), lambda i: (0, 0)),      # w1 (obs rows, folded)
            pl.BlockSpec((act_dim, hidden), lambda i: (0, 0)),      # w1 (action rows)
            pl.BlockSpec((1, hidden), lambda i: (0, 0)),            # b1 (folded)
            pl.BlockSpec((hidden, hidden), lambda i: (0, 0)),       # w2
            pl.BlockSpec((1, hidden), lambda i: (0, 0)),            # b2
            pl.BlockSpec((hidden, out_cols), lambda i: (0, 0)),     # fused head W
            pl.BlockSpec((1, out_cols), lambda i: (0, 0)),          # fused head b
        ],
        out_specs=pl.BlockSpec((tb, out_cols), lambda i: (i, 0)),
        compiler_params=pltpu.CompilerParams(
            dimension_semantics=("parallel",)),
    )(observation, actions, w1_obs, w1_act, b1, w2, b2, w_head, b_head)

    out = out[:B]
    mean_deltas = out[:, :obs_dim]
    normalized_mean = out[:, obs_dim:2 * obs_dim]
    normalized_var = out[:, 2 * obs_dim:3 * obs_dim]
    return mean_deltas, normalized_mean, normalized_var


def init_params(key, observation_size, num_actions, hidden_size):
    """Deterministic synthetic init + normalization statistics."""
    # TODO(synk): hlp.weight_init (custom torch init) replaced with a scaled-normal stand-in.
    ks = jax.random.split(key, 8)

    def dense(k, fan_in, fan_out):
        w = jax.random.normal(k, (fan_in, fan_out), jnp.float32) / jnp.sqrt(fan_in)
        b = jnp.zeros((1, fan_out), jnp.float32)
        return w, b

    in_dim = observation_size + num_actions
    w1, b1 = dense(ks[0], in_dim, hidden_size)
    w2, b2 = dense(ks[1], hidden_size, hidden_size)
    wm, bm = dense(ks[2], hidden_size, observation_size)
    wv, bv = dense(ks[3], hidden_size, observation_size)

    obs_mean = jax.random.normal(ks[4], (1, observation_size), jnp.float32) * 0.1
    obs_std = jnp.abs(jax.random.normal(ks[5], (1, observation_size), jnp.float32)) + 0.5
    delta_mean = jax.random.normal(ks[6], (1, observation_size), jnp.float32) * 0.05
    delta_std = jnp.abs(jax.random.normal(ks[7], (1, observation_size), jnp.float32)) + 0.5

    return {
        "w1": w1, "b1": b1,
        "w2": w2, "b2": b2,
        "wm": wm, "bm": bm,
        "wv": wv, "bv": bv,
        "obs_mean": obs_mean, "obs_std": obs_std,
        "delta_mean": delta_mean, "delta_std": delta_std,
    }


def reference_forward(observation, actions, p):
    """Pure-JAX f32 reference matching the PyTorch forward semantics."""
    norm_obs = (observation - p["obs_mean"]) / p["obs_std"]
    x = jnp.concatenate([norm_obs, actions], axis=1)
    h = jax.nn.relu(x @ p["w1"] + p["b1"])
    h = jax.nn.relu(h @ p["w2"] + p["b2"])
    normalized_mean = h @ p["wm"] + p["bm"]
    logvar = jnp.tanh(h @ p["wv"] + p["bv"])
    normalized_var = jnp.exp(logvar)
    mean_deltas = normalized_mean * p["delta_std"] + p["delta_mean"]
    return mean_deltas, normalized_mean, normalized_var


if __name__ == "__main__":
    observation_size = 16
    num_actions = 8
    hidden_size = 32
    batch = 8

    key = jax.random.PRNGKey(0)
    k_obs, k_act, k_par = jax.random.split(key, 3)

    observation = jax.random.normal(k_obs, (batch, observation_size), jnp.float32)
    actions = jax.random.normal(k_act, (batch, num_actions), jnp.float32)
    params = init_params(k_par, observation_size, num_actions, hidden_size)

    ref = reference_forward(observation, actions, params)

    # 1) Strict semantic check: f32 compute path must match the module exactly.
    out_f32 = simple_dynamics_forward(
        observation, actions, params, compute_dtype=jnp.float32)
    jax.block_until_ready(out_f32)
    for got, want in zip(out_f32, ref):
        np.testing.assert_allclose(np.asarray(got), np.asarray(want),
                                   rtol=1e-4, atol=1e-5)

    # 2) Default fast path: bf16 MXU operands, f32 accumulation (loose tolerance).
    out_bf16 = simple_dynamics_forward(observation, actions, params)
    jax.block_until_ready(out_bf16)
    for got, want in zip(out_bf16, ref):
        np.testing.assert_allclose(np.asarray(got), np.asarray(want),
                                   rtol=5e-2, atol=5e-2)

    print("KERNEL_OK")
</pallas_src>

<mosaic_0001>
module attributes {stable_mosaic.version = 11 : i64} {
  func.func @simple_dynamics_kernel(%arg0: i32, %arg1: memref<8x16xf32, #tpu.memory_space<vmem>>, %arg2: memref<8x8xf32, #tpu.memory_space<vmem>>, %arg3: memref<16x32xf32, #tpu.memory_space<vmem>>, %arg4: memref<8x32xf32, #tpu.memory_space<vmem>>, %arg5: memref<1x32xf32, #tpu.memory_space<vmem>>, %arg6: memref<32x32xf32, #tpu.memory_space<vmem>>, %arg7: memref<1x32xf32, #tpu.memory_space<vmem>>, %arg8: memref<32x128xf32, #tpu.memory_space<vmem>>, %arg9: memref<1x128xf32, #tpu.memory_space<vmem>>, %arg10: memref<8x128xf32, #tpu.memory_space<vmem>>) attributes {dimension_semantics = [#tpu.dimension_semantics<parallel>], iteration_bounds = array<i64: 1>, scalar_prefetch = 0 : i64, scratch_operands = 0 : i64, tpu.core_type = #tpu.core_type<tc>, window_params = [{transform_indices = @transform_0, window_bounds = array<i64: 8, 16>}, {transform_indices = @transform_1, window_bounds = array<i64: 8, 8>}, {pipeline_mode = #tpu.pipeline_mode<synchronous>, transform_indices = @transform_2, window_bounds = array<i64: 16, 32>}, {pipeline_mode = #tpu.pipeline_mode<synchronous>, transform_indices = @transform_3, window_bounds = array<i64: 8, 32>}, {pipeline_mode = #tpu.pipeline_mode<synchronous>, transform_indices = @transform_4, window_bounds = array<i64: 1, 32>}, {pipeline_mode = #tpu.pipeline_mode<synchronous>, transform_indices = @transform_5, window_bounds = array<i64: 32, 32>}, {pipeline_mode = #tpu.pipeline_mode<synchronous>, transform_indices = @transform_6, window_bounds = array<i64: 1, 32>}, {pipeline_mode = #tpu.pipeline_mode<synchronous>, transform_indices = @transform_7, window_bounds = array<i64: 32, 128>}, {pipeline_mode = #tpu.pipeline_mode<synchronous>, transform_indices = @transform_8, window_bounds = array<i64: 1, 128>}, {transform_indices = @transform_9, window_bounds = array<i64: 8, 128>}]} {
    %c0 = arith.constant 0 : index
    %c0_0 = arith.constant 0 : index
    %0 = vector.load %arg1[%c0, %c0_0] : memref<8x16xf32, #tpu.memory_space<vmem>>, vector<8x16xf32>
    %c0_1 = arith.constant 0 : index
    %c0_2 = arith.constant 0 : index
    %1 = vector.load %arg3[%c0_1, %c0_2] : memref<16x32xf32, #tpu.memory_space<vmem>>, vector<16x32xf32>
    %cst = arith.constant dense<0.000000e+00> : vector<8x32xf32>
    %2 = tpu.matmul %0, %1, %cst {dimension_numbers = #tpu.dot_dimension_numbers<[1], [0], [0], [1], [0, 0, 1, 1], [], []>} : vector<8x16xf32>, vector<16x32xf32>, vector<8x32xf32> -> vector<8x32xf32>
    %c0_3 = arith.constant 0 : index
    %c0_4 = arith.constant 0 : index
    %3 = vector.load %arg2[%c0_3, %c0_4] : memref<8x8xf32, #tpu.memory_space<vmem>>, vector<8x8xf32>
    %c0_5 = arith.constant 0 : index
    %c0_6 = arith.constant 0 : index
    %4 = vector.load %arg4[%c0_5, %c0_6] : memref<8x32xf32, #tpu.memory_space<vmem>>, vector<8x32xf32>
    %cst_7 = arith.constant dense<0.000000e+00> : vector<8x32xf32>
    %5 = tpu.matmul %3, %4, %cst_7 {dimension_numbers = #tpu.dot_dimension_numbers<[1], [0], [0], [1], [0, 0, 1, 1], [], []>} : vector<8x8xf32>, vector<8x32xf32>, vector<8x32xf32> -> vector<8x32xf32>
    %6 = arith.addf %2, %5 : vector<8x32xf32>
    %c0_8 = arith.constant 0 : index
    %c0_9 = arith.constant 0 : index
    %7 = vector.load %arg5[%c0_8, %c0_9] : memref<1x32xf32, #tpu.memory_space<vmem>>, vector<1x32xf32>
    %8 = vector.broadcast %7 : vector<1x32xf32> to vector<8x32xf32>
    %9 = arith.addf %6, %8 : vector<8x32xf32>
    %cst_10 = arith.constant 0.000000e+00 : f32
    %10 = vector.broadcast %cst_10 : f32 to vector<8x32xf32>
    %11 = arith.maximumf %9, %10 : vector<8x32xf32>
    %c0_11 = arith.constant 0 : index
    %c0_12 = arith.constant 0 : index
    %12 = vector.load %arg6[%c0_11, %c0_12] : memref<32x32xf32, #tpu.memory_space<vmem>>, vector<32x32xf32>
    %cst_13 = arith.constant dense<0.000000e+00> : vector<8x32xf32>
    %13 = tpu.matmul %11, %12, %cst_13 {dimension_numbers = #tpu.dot_dimension_numbers<[1], [0], [0], [1], [0, 0, 1, 1], [], []>} : vector<8x32xf32>, vector<32x32xf32>, vector<8x32xf32> -> vector<8x32xf32>
    %c0_14 = arith.constant 0 : index
    %c0_15 = arith.constant 0 : index
    %14 = vector.load %arg7[%c0_14, %c0_15] : memref<1x32xf32, #tpu.memory_space<vmem>>, vector<1x32xf32>
    %15 = vector.broadcast %14 : vector<1x32xf32> to vector<8x32xf32>
    %16 = arith.addf %13, %15 : vector<8x32xf32>
    %cst_16 = arith.constant 0.000000e+00 : f32
    %17 = vector.broadcast %cst_16 : f32 to vector<8x32xf32>
    %18 = arith.maximumf %16, %17 : vector<8x32xf32>
    %c0_17 = arith.constant 0 : index
    %c0_18 = arith.constant 0 : index
    %19 = vector.load %arg8[%c0_17, %c0_18] : memref<32x128xf32, #tpu.memory_space<vmem>>, vector<32x128xf32>
    %cst_19 = arith.constant dense<0.000000e+00> : vector<8x128xf32>
    %20 = tpu.matmul %18, %19, %cst_19 {dimension_numbers = #tpu.dot_dimension_numbers<[1], [0], [0], [1], [0, 0, 1, 1], [], []>} : vector<8x32xf32>, vector<32x128xf32>, vector<8x128xf32> -> vector<8x128xf32>
    %c0_20 = arith.constant 0 : index
    %c0_21 = arith.constant 0 : index
    %21 = vector.load %arg9[%c0_20, %c0_21] : memref<1x128xf32, #tpu.memory_space<vmem>>, vector<1x128xf32>
    %22 = vector.broadcast %21 : vector<1x128xf32> to vector<8x128xf32>
    %23 = arith.addf %20, %22 : vector<8x128xf32>
    %24 = tpu.iota {dimensions = array<i32: 1>} : vector<8x128xi32>
    %c32_i32 = arith.constant 32 : i32
    %25 = vector.broadcast %c32_i32 : i32 to vector<8x128xi32>
    %26 = arith.cmpi sge, %24, %25 : vector<8x128xi32>
    %c48_i32 = arith.constant 48 : i32
    %27 = vector.broadcast %c48_i32 : i32 to vector<8x128xi32>
    %28 = arith.cmpi slt, %24, %27 : vector<8x128xi32>
    %29 = arith.andi %26, %28 : vector<8x128xi1>
    %30 = math.tanh %23 : vector<8x128xf32>
    %31 = math.exp %30 : vector<8x128xf32>
    %32 = arith.select %29, %31, %23 : vector<8x128xi1>, vector<8x128xf32>
    %c0_22 = arith.constant 0 : index
    %c0_23 = arith.constant 0 : index
    %33 = vector.load %arg10[%c0_22, %c0_23] : memref<8x128xf32, #tpu.memory_space<vmem>>, vector<8x128xf32>
    tpu.vector_store %arg10[%c0_22, %c0_23], %32 {strides = array<i32>} : memref<8x128xf32, #tpu.memory_space<vmem>>, vector<8x128xf32>,
    return
  }
  func.func @transform_0(%arg0: i32) -> (i32, i32) {
    %c0_i32 = arith.constant 0 : i32
    %c0_i32_0 = arith.constant 0 : i32
    return %arg0, %c0_i32 : i32, i32
  }
  func.func @transform_1(%arg0: i32) -> (i32, i32) {
    %c0_i32 = arith.constant 0 : i32
    %c0_i32_0 = arith.constant 0 : i32
    return %arg0, %c0_i32 : i32, i32
  }
  func.func @transform_2(%arg0: i32) -> (i32, i32) {
    %c0_i32 = arith.constant 0 : i32
    %c0_i32_0 = arith.constant 0 : i32
    %c0_i32_1 = arith.constant 0 : i32
    return %c0_i32, %c0_i32_0 : i32, i32
  }
  func.func @transform_3(%arg0: i32) -> (i32, i32) {
    %c0_i32 = arith.constant 0 : i32
    %c0_i32_0 = arith.constant 0 : i32
    %c0_i32_1 = arith.constant 0 : i32
    return %c0_i32, %c0_i32_0 : i32, i32
  }
  func.func @transform_4(%arg0: i32) -> (i32, i32) {
    %c0_i32 = arith.constant 0 : i32
    %c0_i32_0 = arith.constant 0 : i32
    %c0_i32_1 = arith.constant 0 : i32
    return %c0_i32, %c0_i32_0 : i32, i32
  }
  func.func @transform_5(%arg0: i32) -> (i32, i32) {
    %c0_i32 = arith.constant 0 : i32
    %c0_i32_0 = arith.constant 0 : i32
    %c0_i32_1 = arith.constant 0 : i32
    return %c0_i32, %c0_i32_0 : i32, i32
  }
  func.func @transform_6(%arg0: i32) -> (i32, i32) {
    %c0_i32 = arith.constant 0 : i32
    %c0_i32_0 = arith.constant 0 : i32
    %c0_i32_1 = arith.constant 0 : i32
    return %c0_i32, %c0_i32_0 : i32, i32
  }
  func.func @transform_7(%arg0: i32) -> (i32, i32) {
    %c0_i32 = arith.constant 0 : i32
    %c0_i32_0 = arith.constant 0 : i32
    %c0_i32_1 = arith.constant 0 : i32
    return %c0_i32, %c0_i32_0 : i32, i32
  }
  func.func @transform_8(%arg0: i32) -> (i32, i32) {
    %c0_i32 = arith.constant 0 : i32
    %c0_i32_0 = arith.constant 0 : i32
    %c0_i32_1 = arith.constant 0 : i32
    return %c0_i32, %c0_i32_0 : i32, i32
  }
  func.func @transform_9(%arg0: i32) -> (i32, i32) {
    %c0_i32 = arith.constant 0 : i32
    %c0_i32_0 = arith.constant 0 : i32
    return %arg0, %c0_i32 : i32, i32
  }
}

</mosaic_0001>

<llo_original>
// kernel: tpu_custom_call.1
$region0: #{tpu_custom_call.1}
  #allocation0 [shape = 'u32[]', space=smem, size = 0x4, offset = 0x4, fixed_abs, tag = 'smem constant byte address 0x4 - core index']
  #allocation1 [shape = 'u32[72,128]{1,0:T(1,128)}', space=vmem, size = 0x9000, scoped, tag = 'internal scratch']
  %s0 = inlined_call_operand.hbm [shape: f32[8,16], index: 0, kind: input, shape index: {}]
  %s1 = inlined_call_operand.hbm [shape: f32[8,8], index: 1, kind: input, shape index: {}]
  %s2 = inlined_call_operand.hbm [shape: f32[16,32], index: 2, kind: input, shape index: {}]
  %s3 = inlined_call_operand.hbm [shape: f32[8,32], index: 3, kind: input, shape index: {}]
  %s4 = inlined_call_operand.vmem [shape: f32[1,32], index: 4, kind: input, shape index: {}]
  %s5 = inlined_call_operand.hbm [shape: f32[32,32], index: 5, kind: input, shape index: {}]
  %s6 = inlined_call_operand.vmem [shape: f32[1,32], index: 6, kind: input, shape index: {}]
  %s7 = inlined_call_operand.hbm [shape: f32[32,128], index: 7, kind: input, shape index: {}]
  %s8 = inlined_call_operand.vmem [shape: f32[1,128], index: 8, kind: input, shape index: {}]
  %s9 = inlined_call_operand.hbm [shape: f32[8,128], index: 9, kind: output, shape index: {}]
  %s10 = sld [smem:[#allocation0]]
  $region70: #{tpu_custom_call.1} parent=0
    _
  %s12 = ssub.s32 1, %s10
  %s13 = scalar_select 0, %s12, %s10
  $region1: #{tpu_custom_call.1} parent=0
    #allocation2 [shape = 'u8[4096]{0}', space=vmem, size = 0x1000, scoped, tag = 'input window, operand 0, single buffered']
    #allocation3 [shape = 's32[1]{0}', space=sflag, size = 0x4, scoped, tag = 'scoped memory for tpu_custom_call.1']
    #allocation4 [shape = 's32[1]{0}', space=sflag, size = 0x4, scoped, tag = 'scoped memory for tpu_custom_call.1']
    #allocation5 [shape = 'u8[4096]{0}', space=vmem, size = 0x1000, scoped, tag = 'input window, operand 1, single buffered']
    #allocation6 [shape = 's32[1]{0}', space=sflag, size = 0x4, scoped, tag = 'scoped memory for tpu_custom_call.1']
    #allocation7 [shape = 'u8[8192]{0}', space=vmem, size = 0x2000, scoped, tag = 'input window, operand 2, single buffered']
    #allocation8 [shape = 'u8[4096]{0}', space=vmem, size = 0x1000, scoped, tag = 'input window, operand 3, single buffered']
    #allocation9 [shape = 's32[1]{0}', space=sflag, size = 0x4, scoped, tag = 'scoped memory for tpu_custom_call.1']
    #allocation10 [shape = 'u8[16384]{0}', space=vmem, size = 0x4000, scoped, tag = 'input window, operand 5, single buffered']
    #allocation11 [shape = 'u8[16384]{0}', space=vmem, size = 0x4000, scoped, tag = 'input window, operand 7, single buffered']
    #allocation12 [shape = 's32[1]{0}', space=sflag, size = 0x4, scoped, tag = 'scoped memory for tpu_custom_call.1']
    #allocation13 [shape = 'u8[4096]{0}', space=vmem, size = 0x1000, scoped, tag = 'output window, operand 0, single buffered']
    %14 = vsyncpa [#allocation3], 0
    %15 = vsyncpa [#allocation6], 0
    %16 = vsyncpa [#allocation9], 0
    %17 = vsyncpa [#allocation12], 0
    %18 = vsyncpa [#allocation4], 0
    // Predicated region
    $region2: #{tpu_custom_call.1} parent=1 // pred_check
      _
    $region3: #{tpu_custom_call.1} parent=1 // pred_check_branch
      %20 = sbr.rel (0) target = $region5
    $region4: #{tpu_custom_call.1} parent=1 // pred_region
      %22 = vsyncadd [#allocation3], 0
      %s24 = sshll.u32 %s0, 4
      %s25 = int_to_ptr.hbm [resolvable:$true] %s24
      %s26 = sshll.u32 [#allocation2], 4
      %s27 = int_to_ptr.vmem [resolvable:$true] %s26
      %29 = dma.hbm_to_vmem [thread:$0]  %s25, 128, %s27, [#allocation3]
    $region5: #{tpu_custom_call.1} parent=1 // pred_fallthru
      _
    // Predicated region
    $region6: #{tpu_custom_call.1} parent=1 // pred_check
      _
    $region7: #{tpu_custom_call.1} parent=1 // pred_check_branch
      %31 = sbr.rel (0) target = $region9
    $region8: #{tpu_custom_call.1} parent=1 // pred_region
      %33 = vsyncadd [#allocation6], 0
      %s35 = sshll.u32 %s1, 4
      %s36 = int_to_ptr.hbm [resolvable:$true] %s35
      %s37 = sshll.u32 [#allocation5], 4
      %s38 = int_to_ptr.vmem [resolvable:$true] %s37
      %40 = dma.hbm_to_vmem [thread:$0]  %s36, 128, %s38, [#allocation6]
    $region9: #{tpu_custom_call.1} parent=1 // pred_fallthru
      _
    // Predicated region
    $region10: #{tpu_custom_call.1} parent=1 // pred_check
      _
    $region11: #{tpu_custom_call.1} parent=1 // pred_check_branch
      %42 = sbr.rel (0) target = $region13
    $region12: #{tpu_custom_call.1} parent=1 // pred_region
      %44 = vsyncadd [#allocation6], 0
      %s45 = sshll.u32 %s2, 4
      %s46 = int_to_ptr.hbm [resolvable:$true] %s45
      %s47 = sshll.u32 [#allocation7], 4
      %s48 = int_to_ptr.vmem [resolvable:$true] %s47
      %53 = dma.hbm_to_vmem [thread:$0]  %s46, 256, %s48, [#allocation6], 128, 128, 8
    $region13: #{tpu_custom_call.1} parent=1 // pred_fallthru
      _
    // Predicated region
    $region14: #{tpu_custom_call.1} parent=1 // pred_check
      _
    $region15: #{tpu_custom_call.1} parent=1 // pred_check_branch
      %55 = sbr.rel (0) target = $region17
    $region16: #{tpu_custom_call.1} parent=1 // pred_region
      %57 = vsyncadd [#allocation9], 0
      %s59 = sshll.u32 %s3, 4
      %s60 = int_to_ptr.hbm [resolvable:$true] %s59
      %s61 = sshll.u32 [#allocation8], 4
      %s62 = int_to_ptr.vmem [resolvable:$true] %s61
      %64 = dma.hbm_to_vmem [thread:$0]  %s60, 128, %s62, [#allocation9]
    $region17: #{tpu_custom_call.1} parent=1 // pred_fallthru
      _
    // Predicated region
    $region18: #{tpu_custom_call.1} parent=1 // pred_check
      _
    $region19: #{tpu_custom_call.1} parent=1 // pred_check_branch
      %66 = sbr.rel (0) target = $region21
    $region20: #{tpu_custom_call.1} parent=1 // pred_region
      _
    $region21: #{tpu_custom_call.1} parent=1 // pred_fallthru
      _
    // Predicated region
    $region22: #{tpu_custom_call.1} parent=1 // pred_check
      _
    $region23: #{tpu_custom_call.1} parent=1 // pred_check_branch
      %68 = sbr.rel (0) target = $region25
    $region24: #{tpu_custom_call.1} parent=1 // pred_region
      %70 = vsyncadd [#allocation9], 0
      %s71 = sshll.u32 %s5, 4
      %s72 = int_to_ptr.hbm [resolvable:$true] %s71
      %s73 = sshll.u32 [#allocation10], 4
      %s74 = int_to_ptr.vmem [resolvable:$true] %s73
      %79 = dma.hbm_to_vmem [thread:$0]  %s72, 512, %s74, [#allocation9], 128, 128, 8
    $region25: #{tpu_custom_call.1} parent=1 // pred_fallthru
      _
    // Predicated region
    $region26: #{tpu_custom_call.1} parent=1 // pred_check
      _
    $region27: #{tpu_custom_call.1} parent=1 // pred_check_branch
      %81 = sbr.rel (0) target = $region29
    $region28: #{tpu_custom_call.1} parent=1 // pred_region
      _
    $region29: #{tpu_custom_call.1} parent=1 // pred_fallthru
      _
    // Predicated region
    $region30: #{tpu_custom_call.1} parent=1 // pred_check
      _
    $region31: #{tpu_custom_call.1} parent=1 // pred_check_branch
      %83 = sbr.rel (0) target = $region33
    $region32: #{tpu_custom_call.1} parent=1 // pred_region
      %85 = vsyncadd [#allocation12], 0
      %s86 = sshll.u32 %s7, 4
      %s87 = int_to_ptr.hbm [resolvable:$true] %s86
      %s88 = sshll.u32 [#allocation11], 4
      %s89 = int_to_ptr.vmem [resolvable:$true] %s88
      %94 = dma.hbm_to_vmem [thread:$0]  %s87, 512, %s89, [#allocation12], 128, 128, 8
    $region33: #{tpu_custom_call.1} parent=1 // pred_fallthru
      _
    // Predicated region
    $region34: #{tpu_custom_call.1} parent=1 // pred_check
      _
    $region35: #{tpu_custom_call.1} parent=1 // pred_check_branch
      %96 = sbr.rel (0) target = $region37
    $region36: #{tpu_custom_call.1} parent=1 // pred_region
      _
    $region37: #{tpu_custom_call.1} parent=1 // pred_fallthru
      _
    // Predicated region
    $region38: #{tpu_custom_call.1} parent=1 // pred_check
      _
    $region39: #{tpu_custom_call.1} parent=1 // pred_check_branch
      %98 = sbr.rel (0) target = $region41
    $region40: #{tpu_custom_call.1} parent=1 // pred_region
      %100 = dma.done [#allocation3], 128
    $region41: #{tpu_custom_call.1} parent=1 // pred_fallthru
      _
    // Predicated region
    $region42: #{tpu_custom_call.1} parent=1 // pred_check
      _
    $region43: #{tpu_custom_call.1} parent=1 // pred_check_branch
      %102 = sbr.rel (0) target = $region45
    $region44: #{tpu_custom_call.1} parent=1 // pred_region
      %104 = dma.done [#allocation6], 128
    $region45: #{tpu_custom_call.1} parent=1 // pred_fallthru
      _
    // Predicated region
    $region46: #{tpu_custom_call.1} parent=1 // pred_check
      _
    $region47: #{tpu_custom_call.1} parent=1 // pred_check_branch
      %106 = sbr.rel (0) target = $region49
    $region48: #{tpu_custom_call.1} parent=1 // pred_region
      %108 = dma.done [#allocation6], 256
    $region49: #{tpu_custom_call.1} parent=1 // pred_fallthru
      _
    // Predicated region
    $region50: #{tpu_custom_call.1} parent=1 // pred_check
      _
    $region51: #{tpu_custom_call.1} parent=1 // pred_check_branch
      %110 = sbr.rel (0) target = $region53
    $region52: #{tpu_custom_call.1} parent=1 // pred_region
      %112 = dma.done [#allocation9], 128
    $region53: #{tpu_custom_call.1} parent=1 // pred_fallthru
      _
    // Predicated region
    $region54: #{tpu_custom_call.1} parent=1 // pred_check
      _
    $region55: #{tpu_custom_call.1} parent=1 // pred_check_branch
      %114 = sbr.rel (0) target = $region57
    $region56: #{tpu_custom_call.1} parent=1 // pred_region
      %116 = dma.done [#allocation9], 512
    $region57: #{tpu_custom_call.1} parent=1 // pred_fallthru
      _
    // Predicated region
    $region58: #{tpu_custom_call.1} parent=1 // pred_check
      _
    $region59: #{tpu_custom_call.1} parent=1 // pred_check_branch
      %118 = sbr.rel (0) target = $region61
    $region60: #{tpu_custom_call.1} parent=1 // pred_region
      %120 = dma.done [#allocation12], 512
    $region61: #{tpu_custom_call.1} parent=1 // pred_fallthru
      _
    %v121 = vld [vmem:[#allocation2] sm:$0xff]
    %v122 = vld [vmem:[#allocation7] sm:$0xff]
    %v123 = vld [vmem:[#allocation7 + $0x8] sm:$0xff]
    %v124 = vld [vmem:[#allocation5] sm:$0xff]
    %v125 = vld [vmem:[#allocation8] sm:$0xff]
    %vm126 = vcmask 64512
    %v128 = vsel %vm126, %v124, 0
    %130 = vmatpush.msra.mxu0 0.0
    %131 = vmatpush.msra.mxu0 0.0
    %132 = vmatpush.msra.mxu0 0.0
    %133 = vmatpush.msra.mxu0 0.0
    %134 = vmatpush.msra.mxu0 0.0
    %135 = vmatpush.msra.mxu0 0.0
    %136 = vmatpush.msra.mxu0 0.0
    %137 = vmatpush.msra.mxu0 0.0
    %138 = vmatpush.msra.mxu0 0.0
    %139 = vmatpush.msra.mxu0 0.0
    %140 = vmatpush.msra.mxu0 0.0
    %141 = vmatpush.msra.mxu0 0.0
    %142 = vmatpush.msra.mxu0 0.0
    %143 = vmatpush.msra.mxu0 0.0
    %144 = vmatpush.msra.mxu0 0.0
    %145 = vmatpush.msra.mxu0 %v125
    %146 = vmatmul.f32.gmra.mxu0 %v128
    %v147 = vpop.f32.mrf.mxu0
    %v148 = vadd.f32 0.0, %v147
    %149 = vdwg.mxu0
    %vm150 = vcmask 130048
    %v152 = vsel %vm150, %v121, 0
    %154 = vmatpush.msra.mxu0 0.0
    %155 = vmatpush.msra.mxu0 0.0
    %156 = vmatpush.msra.mxu0 0.0
    %157 = vmatpush.msra.mxu0 0.0
    %158 = vmatpush.msra.mxu0 0.0
    %159 = vmatpush.msra.mxu0 0.0
    %160 = vmatpush.msra.mxu0 0.0
    %161 = vmatpush.msra.mxu0 0.0
    %162 = vmatpush.msra.mxu0 0.0
    %163 = vmatpush.msra.mxu0 0.0
    %164 = vmatpush.msra.mxu0 0.0
    %165 = vmatpush.msra.mxu0 0.0
    %166 = vmatpush.msra.mxu0 0.0
    %167 = vmatpush.msra.mxu0 0.0
    %168 = vmatpush.msra.mxu0 %v123
    %169 = vmatpush.msra.mxu0 %v122
    %170 = vmatmul.f32.gmra.mxu0 %v152
    %v171 = vpop.f32.mrf.mxu0
    %v172 = vadd.f32 %v148, %v171
    %173 = vdwg.mxu0
    %v174 = vld [vmem:[%s4] sm:$0x1]
    %v176 = vperm.slane %v174, 0
    %v178 = vadd.f32 %v172, %v176
    %v179 = vmax.f32 %v178, 0.0
    %v180 = vld [vmem:[#allocation10] sm:$0xff]
    %v181 = vld [vmem:[#allocation10 + $0x8] sm:$0xff]
    %v182 = vld [vmem:[#allocation10 + $0x10] sm:$0xff]
    %v183 = vld [vmem:[#allocation10 + $0x18] sm:$0xff]
    %v184 = vld [vmem:[%s6] sm:$0x1]
    %v186 = vperm.slane %v184, 0
    %vm188 = vcmask 261120
    %v190 = vsel %vm188, %v179, 0
    %192 = vmatpush.msra.mxu0 0.0
    %193 = vmatpush.msra.mxu0 0.0
    %194 = vmatpush.msra.mxu0 0.0
    %195 = vmatpush.msra.mxu0 0.0
    %196 = vmatpush.msra.mxu0 0.0
    %197 = vmatpush.msra.mxu0 0.0
    %198 = vmatpush.msra.mxu0 0.0
    %199 = vmatpush.msra.mxu0 0.0
    %200 = vmatpush.msra.mxu0 0.0
    %201 = vmatpush.msra.mxu0 0.0
    %202 = vmatpush.msra.mxu0 0.0
    %203 = vmatpush.msra.mxu0 0.0
    %204 = vmatpush.msra.mxu0 %v183
    %205 = vmatpush.msra.mxu0 %v182
    %206 = vmatpush.msra.mxu0 %v181
    %207 = vmatpush.msra.mxu0 %v180
    %208 = vmatmul.f32.gmra.mxu0 %v190
    %v209 = vpop.f32.mrf.mxu0
    %v210 = vadd.f32 %v186, %v209
    %211 = vdwg.mxu0
    %v212 = vmax.f32 %v210, 0.0
    %v213 = vld [vmem:[#allocation11] sm:$0xff]
    %v214 = vld [vmem:[#allocation11 + $0x8] sm:$0xff]
    %v215 = vld [vmem:[#allocation11 + $0x10] sm:$0xff]
    %v216 = vld [vmem:[#allocation11 + $0x18] sm:$0xff]
    %v217 = vld [vmem:[%s8] sm:$0x1]
    %v219 = vperm.slane %v217, 0
    %v222 = vsel %vm188, %v212, 0
    %224 = vmatpush.msra.mxu0 0.0
    %225 = vmatpush.msra.mxu0 0.0
    %226 = vmatpush.msra.mxu0 0.0
    %227 = vmatpush.msra.mxu0 0.0
    %228 = vmatpush.msra.mxu0 0.0
    %229 = vmatpush.msra.mxu0 0.0
    %230 = vmatpush.msra.mxu0 0.0
    %231 = vmatpush.msra.mxu0 0.0
    %232 = vmatpush.msra.mxu0 0.0
    %233 = vmatpush.msra.mxu0 0.0
    %234 = vmatpush.msra.mxu0 0.0
    %235 = vmatpush.msra.mxu0 0.0
    %236 = vmatpush.msra.mxu0 %v216
    %237 = vmatpush.msra.mxu0 %v215
    %238 = vmatpush.msra.mxu0 %v214
    %239 = vmatpush.msra.mxu0 %v213
    %240 = vmatmul.f32.gmra.mxu0 %v222
    %v241 = vpop.f32.mrf.mxu0
    %v242 = vadd.f32 %v219, %v241
    %243 = vdwg.mxu0
    %v244 = vlaneseq
    %v245 = vand.u32 %v244, 127
    %vm246 = vcmp.ge.s32.totalorder %v245, 32
    %vm247 = vcmp.lt.s32.totalorder %v245, 48
    %vm248 = vmand %vm246, %vm247
    %v249 = vtanh.pop %v242
    %v250 = vmul.f32 %v249, 1.442695
    %v251 = vpow.pop %v250
    %v252 = vsel %vm248, %v251, %v242
    %253 = vst [vmem:[#allocation13] sm:$0xff] %v252
    // Predicated region
    $region62: #{tpu_custom_call.1} parent=1 // pred_check
      _
    $region63: #{tpu_custom_call.1} parent=1 // pred_check_branch
      %255 = sbr.rel (0) target = $region65
    $region64: #{tpu_custom_call.1} parent=1 // pred_region
      %257 = vsyncadd [#allocation4], 0
      %s259 = sshll.u32 [#allocation13], 4
      %s260 = int_to_ptr.vmem [resolvable:$true] %s259
      %s261 = sshll.u32 %s9, 4
      %s262 = int_to_ptr.hbm [resolvable:$true] %s261
      %264 = dma.vmem_to_hbm [thread:$0]  %s260, 128, %s262, [#allocation4]
    $region65: #{tpu_custom_call.1} parent=1 // pred_fallthru
      _
    // Predicated region
    $region66: #{tpu_custom_call.1} parent=1 // pred_check
      _
    $region67: #{tpu_custom_call.1} parent=1 // pred_check_branch
      %266 = sbr.rel (0) target = $region69
    $region68: #{tpu_custom_call.1} parent=1 // pred_region
      %268 = dma.done [#allocation4], 128
    $region69: #{tpu_custom_call.1} parent=1 // pred_fallthru
      _
    %269 = vsyncpa [#allocation3], 1
    %270 = vsyncpa [#allocation6], 1
    %271 = vsyncpa [#allocation9], 1
    %272 = vsyncpa [#allocation12], 1
    %273 = vsyncpa [#allocation4], 1

</llo_original>
